<compile_context>
chip_gen: v6e
topology: v6e:2x2x1
jax: 0.10.0
libtpu: 0.0.40
codegen_flags: <defaults>
</compile_context>

<pallas_src>
import functools

import jax
import jax.numpy as jnp
from jax.experimental import pallas as pl
from jax.experimental.pallas import tpu as pltpu


def _cbam_kernel(x_ref, pool_ref, w1_ref, w2_ref, ws1_ref, sh1_ref,
                 wc3_ref, sh2_ref, ws3_ref, mask_ref, out_ref,
                 x1_ref, stk_ref, *, W, HW, Bt):
    """One packed slab: x_ref is (C, L) bf16 with Bt images along the lane axis."""
    C, L = x_ref.shape
    Crp = ws1_ref.shape[0]                # reduced channels, padded to multiple of 8
    xb = x_ref[...]                       # (C, L) io dtype (bf16)

    # ---------------- channel attention ----------------
    # AdaptiveAvgPool2d(1): per-image lane sum via an exact 0/1 one-hot matmul
    # (bf16 straight into the MXU, f32 accumulate), then * 1/HW on the VPU.
    pooled = jnp.dot(xb, pool_ref[...],
                     preferred_element_type=jnp.float32) * (1.0 / HW)          # (C, Bt)
    hid = jnp.maximum(
        jnp.dot(w1_ref[...], pooled, preferred_element_type=jnp.float32), 0.0)  # (Crp, Bt)
    ca = jax.nn.sigmoid(
        jnp.dot(w2_ref[...], hid, preferred_element_type=jnp.float32))          # (C, Bt)

    # x1 = x * ca, broadcast per packed image with static lane segments (no
    # broadcast matmul, no extra (C, L) ca slab).  Padded lanes are zeroed so
    # everything downstream stays finite.
    for bt in range(Bt):
        lo, hi = bt * HW, (bt + 1) * HW
        x1_ref[:, lo:hi] = xb[:, lo:hi].astype(jnp.float32) * ca[:, bt:bt + 1]
    if L > Bt * HW:
        x1_ref[:, Bt * HW:L] = jnp.zeros((C, L - Bt * HW), jnp.float32)
    x1 = x1_ref[...]                                                           # (C, L) f32

    # ---------------- spatial attention ----------------
    # 1x1 conv (BN1 scale folded into the weight) + BN1 shift + ReLU.
    y1 = jnp.maximum(
        jnp.dot(ws1_ref[...], x1, preferred_element_type=jnp.float32) + sh1_ref[...],
        0.0)                                                                   # (Crp, L)

    # 3x3 conv, padding=1: one matmul over 9 masked, lane-rolled taps stacked
    # along the contraction axis.  row[dh][:, j] = y1[:, (j + dh*W) % L]; the
    # +-1 column shifts are cheap single-lane rolls on top (8 rolls total).
    row = {0: y1}
    if W % L:
        row[-1] = pltpu.roll(y1, shift=W % L, axis=1)
        row[1] = pltpu.roll(y1, shift=(L - W) % L, axis=1)
    else:                                 # degenerate H == 1, Bt == 1 case
        row[-1] = y1
        row[1] = y1
    t = 0
    for dh in (-1, 0, 1):
        for dw in (-1, 0, 1):
            shift = (-dw) % L
            tap = row[dh] if shift == 0 else pltpu.roll(row[dh], shift=shift, axis=1)
            # host-precomputed (1, L) validity mask (also 0 on padded lanes):
            # invalid taps (crossing an image edge / the lane padding) -> 0.
            stk_ref[t * Crp:(t + 1) * Crp, :] = tap * mask_ref[t:t + 1, :]
            t += 1

    # single MXU push with contraction dim 9*Crp (BN2 scale folded into wc3)
    y2 = jnp.maximum(
        jnp.dot(wc3_ref[...], stk_ref[...], preferred_element_type=jnp.float32)
        + sh2_ref[...], 0.0)                                                   # (Crp, L)
    sa = jax.nn.sigmoid(
        jnp.dot(ws3_ref[...], y2, preferred_element_type=jnp.float32))         # (1, L)

    out_ref[...] = (x1 * sa).astype(out_ref.dtype)


def _vmem_capacity_bytes():
    try:
        return int(pltpu.get_tpu_info().vmem_capacity_bytes)
    except Exception:
        return 64 << 20                   # conservative fallback (v7x per-core VMEM)


def _vmem_estimate(C, L, Crp, Bt, io_itemsize):
    io = 2 * 2 * C * L * io_itemsize                    # double-buffered in + out slabs
    scratch = (C * L + 9 * Crp * L) * 4                 # x1 + stacked-tap scratch (f32)
    live = (2 * C * L + 8 * Crp * L) * 4                # transient f32 values (rough)
    consts = 2 * (L * Bt * io_itemsize + 9 * L * 4) \
        + 8 * Crp * (2 * C + 9 * Crp + 4)
    return io + scratch + live + consts + (2 << 20)


def _choose_packing(B, HW, C, Crp, io_itemsize, budget):
    """Pick how many images (Bt) to pack along the lane axis.

    Preference: fits in the VMEM budget > lane-dense (zero padding) > at least
    two grid steps (keeps both v7x TensorCores busy) > bigger tiles (amortize
    the ~0.35us per-step pipeline overhead)."""
    best = None
    for bt in range(1, B + 1):
        if B % bt:
            continue
        l_real = bt * HW
        lpad = -(-l_real // 128) * 128
        waste = (lpad - l_real) / lpad
        bg = B // bt
        fits = _vmem_estimate(C, lpad, Crp, bt, io_itemsize) <= budget
        key = (0 if fits else 1, waste, 0 if bg >= 2 else 1, -bt)
        if best is None or key < best[0]:
            best = (key, bt, bg, lpad)
    return best[1], best[2], best[3]


def cbam_pallas(x, params, reduction=16, eps=1e-5, io_dtype=jnp.bfloat16):
    (w1, w2, ws1, g1, b1, m1, v1, wc3, g2, b2, m2, v2, ws3) = params
    B, C, H, W = x.shape
    Cr = C // reduction
    assert Cr >= 1, "channels must be >= reduction"
    HW = H * W

    # reduced channel dim padded to a multiple of 8 sublanes (zero pad, exact math)
    Crp = max(8, -(-Cr // 8) * 8)
    io_itemsize = jnp.dtype(io_dtype).itemsize

    capacity = _vmem_capacity_bytes()
    budget = int(0.7 * capacity)
    Bt, Bg, L = _choose_packing(B, HW, C, Crp, io_itemsize, budget)
    L_real = Bt * HW

    # ---- pack Bt images along lanes; zero-pad lanes to a multiple of 128 ----
    xg = (x.reshape(Bg, Bt, C, HW)
            .transpose(0, 2, 1, 3)
            .reshape(Bg, C, L_real))
    if L > L_real:
        xg = jnp.pad(xg, ((0, 0), (0, 0), (0, L - L_real)))
    xg = xg.astype(io_dtype)

    # ---- fold BatchNorm (eval mode) into conv weights (host side, free) ----
    inv1 = g1 / jnp.sqrt(v1 + eps)
    inv2 = g2 / jnp.sqrt(v2 + eps)
    ws1_sc = ws1 * inv1[:, None]                    # (Cr, C)
    sh1 = (b1 - m1 * inv1)[:, None]                 # (Cr, 1)
    wc3_sc = wc3 * inv2[:, None, None, None]        # (Cr, Cr, 3, 3)
    sh2 = (b2 - m2 * inv2)[:, None]                 # (Cr, 1)

    pc = Crp - Cr
    w1_p = jnp.pad(w1, ((0, pc), (0, 0))).astype(jnp.float32)
    w2_p = jnp.pad(w2, ((0, 0), (0, pc))).astype(jnp.float32)
    ws1_p = jnp.pad(ws1_sc, ((0, pc), (0, 0))).astype(jnp.float32)
    sh1_p = jnp.pad(sh1, ((0, pc), (0, 0))).astype(jnp.float32)
    sh2_p = jnp.pad(sh2, ((0, pc), (0, 0))).astype(jnp.float32)
    ws3_p = jnp.pad(ws3, ((0, 0), (0, pc))).astype(jnp.float32)
    wc3_p = jnp.pad(wc3_sc, ((0, pc), (0, pc), (0, 0), (0, 0)))
    # (Crp_out, Crp_in, 3, 3) -> (Crp_out, 9*Crp_in); column = (kh*3+kw)*Crp + in_ch
    wc3_flat = (wc3_p.transpose(2, 3, 0, 1)
                      .reshape(9, Crp, Crp)
                      .transpose(1, 0, 2)
                      .reshape(Crp, 9 * Crp)).astype(jnp.float32)

    # ---- host-precomputed lane tables (static; keeps div/mod off the VPU) ----
    lane = jnp.arange(L)
    valid_lane = lane < L_real
    seg = lane // HW
    # exact 0/1 pooling one-hot (bf16-safe); the /HW fold happens in-kernel.
    pool_mat = ((seg[:, None] == jnp.arange(Bt)[None, :]) & valid_lane[:, None]
                ).astype(io_dtype)                                   # (L, Bt)
    h_idx = (lane % HW) // W
    w_idx = lane % W
    rows = []
    for dh in (-1, 0, 1):
        for dw in (-1, 0, 1):
            ok = (valid_lane & (h_idx + dh >= 0) & (h_idx + dh < H)
                  & (w_idx + dw >= 0) & (w_idx + dw < W))
            rows.append(ok)
    tap_masks = jnp.stack(rows).astype(jnp.float32)                  # (9, L)

    kernel = functools.partial(_cbam_kernel, W=W, HW=HW, Bt=Bt)

    def const_spec(arr):
        n = arr.ndim
        return pl.BlockSpec(arr.shape, lambda g, _n=n: (0,) * _n)

    est = _vmem_estimate(C, L, Crp, Bt, io_itemsize)
    vmem_limit = int(min(max(2 * est, 32 << 20), int(0.9 * capacity)))

    out = pl.pallas_call(
        kernel,
        out_shape=jax.ShapeDtypeStruct((Bg, C, L), io_dtype),
        grid_spec=pltpu.PrefetchScalarGridSpec(
            num_scalar_prefetch=0,
            grid=(Bg,),
            in_specs=[
                pl.BlockSpec((None, C, L), lambda g: (g, 0, 0)),  # packed bf16 input slab
                const_spec(pool_mat),
                const_spec(w1_p),
                const_spec(w2_p),
                const_spec(ws1_p),
                const_spec(sh1_p),
                const_spec(wc3_flat),
                const_spec(sh2_p),
                const_spec(ws3_p),
                const_spec(tap_masks),
            ],
            out_specs=pl.BlockSpec((None, C, L), lambda g: (g, 0, 0)),
            scratch_shapes=[
                pltpu.VMEM((C, L), jnp.float32),          # x1 = x * channel_attention
                pltpu.VMEM((9 * Crp, L), jnp.float32),    # stacked 3x3 taps
            ],
        ),
        compiler_params=pltpu.CompilerParams(
            dimension_semantics=("parallel",),
            vmem_limit_bytes=vmem_limit,
        ),
    )(xg, pool_mat, w1_p, w2_p, ws1_p, sh1_p, wc3_flat, sh2_p, ws3_p, tap_masks)

    out = out[:, :, :L_real]
    return (out.reshape(Bg, C, Bt, HW)
               .transpose(0, 2, 1, 3)
               .reshape(B, C, H, W)
               .astype(x.dtype))


def cbam_ref(x, params, eps=1e-5):
    """Pure-JAX reference matching the PyTorch forward (BN in eval mode)."""
    (w1, w2, ws1, g1, b1, m1, v1, wc3, g2, b2, m2, v2, ws3) = params
    B, C, H, W = x.shape

    pooled = x.mean(axis=(2, 3))                     # (B, C)
    hid = jax.nn.relu(pooled @ w1.T)                 # (B, Cr)
    ca = jax.nn.sigmoid(hid @ w2.T)                  # (B, C)
    x1 = x * ca[:, :, None, None]

    def bn(y, g, b, m, v):
        return ((y - m[None, :, None, None]) / jnp.sqrt(v + eps)[None, :, None, None]
                * g[None, :, None, None] + b[None, :, None, None])

    y1 = jax.nn.relu(bn(jnp.einsum('oc,bchw->bohw', ws1, x1), g1, b1, m1, v1))
    y1p = jnp.pad(y1, ((0, 0), (0, 0), (1, 1), (1, 1)))
    y2 = jnp.zeros_like(y1)
    for kh in range(3):
        for kw in range(3):
            y2 = y2 + jnp.einsum('on,bnhw->bohw', wc3[:, :, kh, kw],
                                 y1p[:, :, kh:kh + H, kw:kw + W])
    y2 = jax.nn.relu(bn(y2, g2, b2, m2, v2))
    sa = jax.nn.sigmoid(jnp.einsum('om,bmhw->bohw', ws3, y2))
    return x1 * sa


def init_params(key, C, reduction=16):
    Cr = C // reduction
    ks = jax.random.split(key, 13)
    w1 = 0.3 * jax.random.normal(ks[0], (Cr, C), jnp.float32)   # Conv2d(C, Cr, 1).weight[:, :, 0, 0]
    w2 = 0.3 * jax.random.normal(ks[1], (C, Cr), jnp.float32)   # Conv2d(Cr, C, 1).weight[:, :, 0, 0]
    ws1 = 0.3 * jax.random.normal(ks[2], (Cr, C), jnp.float32)  # spatial Conv2d(C, Cr, 1)
    g1 = 1.0 + 0.1 * jax.random.normal(ks[3], (Cr,), jnp.float32)
    b1 = 0.1 * jax.random.normal(ks[4], (Cr,), jnp.float32)
    m1 = 0.1 * jax.random.normal(ks[5], (Cr,), jnp.float32)
    v1 = 1.0 + 0.1 * jax.random.uniform(ks[6], (Cr,), jnp.float32)
    wc3 = 0.3 * jax.random.normal(ks[7], (Cr, Cr, 3, 3), jnp.float32)  # Conv2d(Cr, Cr, 3, padding=1)
    g2 = 1.0 + 0.1 * jax.random.normal(ks[8], (Cr,), jnp.float32)
    b2 = 0.1 * jax.random.normal(ks[9], (Cr,), jnp.float32)
    m2 = 0.1 * jax.random.normal(ks[10], (Cr,), jnp.float32)
    v2 = 1.0 + 0.1 * jax.random.uniform(ks[11], (Cr,), jnp.float32)
    ws3 = 0.3 * jax.random.normal(ks[12], (1, Cr), jnp.float32)  # Conv2d(Cr, 1, 1)
    return (w1, w2, ws1, g1, b1, m1, v1, wc3, g2, b2, m2, v2, ws3)


if __name__ == "__main__":
    B, C, H, W = 2, 32, 8, 8
    reduction = 16

    key = jax.random.PRNGKey(0)
    kx, kp = jax.random.split(key)
    x = jax.random.normal(kx, (B, C, H, W), jnp.float32)
    params = init_params(kp, C, reduction)

    out = cbam_pallas(x, params, reduction=reduction)
    out = jax.block_until_ready(out)

    # Compare against the reference evaluated on the bf16-rounded input (the
    # kernel's slab I/O is bf16); remaining error is dominated by the single
    # bf16 quantization of the output (~0.4% relative).
    x_q = x.astype(jnp.bfloat16).astype(jnp.float32)
    ref = cbam_ref(x_q, params)
    assert out.shape == (B, C, H, W), out.shape
    if not jnp.allclose(out, ref, rtol=2e-2, atol=2e-2):
        max_err = float(jnp.max(jnp.abs(out - ref)))
        raise AssertionError(f"Pallas CBAM mismatch vs reference, max abs err = {max_err}")

    print("KERNEL_OK")
</pallas_src>

<mosaic_0001>
module attributes {stable_mosaic.version = 11 : i64} {
  func.func @_cbam_kernel(%arg0: i32, %arg1: memref<1x32x128xbf16, #tpu.memory_space<vmem>>, %arg2: memref<128x2xbf16, #tpu.memory_space<vmem>>, %arg3: memref<8x32xf32, #tpu.memory_space<vmem>>, %arg4: memref<32x8xf32, #tpu.memory_space<vmem>>, %arg5: memref<8x32xf32, #tpu.memory_space<vmem>>, %arg6: memref<8x1xf32, #tpu.memory_space<vmem>>, %arg7: memref<8x72xf32, #tpu.memory_space<vmem>>, %arg8: memref<8x1xf32, #tpu.memory_space<vmem>>, %arg9: memref<1x8xf32, #tpu.memory_space<vmem>>, %arg10: memref<9x128xf32, #tpu.memory_space<vmem>>, %arg11: memref<1x32x128xbf16, #tpu.memory_space<vmem>>, %arg12: memref<32x128xf32, #tpu.memory_space<vmem>>, %arg13: memref<72x128xf32, #tpu.memory_space<vmem>>) attributes {dimension_semantics = [#tpu.dimension_semantics<parallel>], iteration_bounds = array<i64: 1>, scalar_prefetch = 0 : i64, scratch_operands = 2 : i64, tpu.core_type = #tpu.core_type<tc>, window_params = [{transform_indices = @transform_0, window_bounds = array<i64: 1, 32, 128>}, {pipeline_mode = #tpu.pipeline_mode<synchronous>, transform_indices = @transform_1, window_bounds = array<i64: 128, 2>}, {pipeline_mode = #tpu.pipeline_mode<synchronous>, transform_indices = @transform_2, window_bounds = array<i64: 8, 32>}, {pipeline_mode = #tpu.pipeline_mode<synchronous>, transform_indices = @transform_3, window_bounds = array<i64: 32, 8>}, {pipeline_mode = #tpu.pipeline_mode<synchronous>, transform_indices = @transform_4, window_bounds = array<i64: 8, 32>}, {pipeline_mode = #tpu.pipeline_mode<synchronous>, transform_indices = @transform_5, window_bounds = array<i64: 8, 1>}, {pipeline_mode = #tpu.pipeline_mode<synchronous>, transform_indices = @transform_6, window_bounds = array<i64: 8, 72>}, {pipeline_mode = #tpu.pipeline_mode<synchronous>, transform_indices = @transform_7, window_bounds = array<i64: 8, 1>}, {pipeline_mode = #tpu.pipeline_mode<synchronous>, transform_indices = @transform_8, window_bounds = array<i64: 1, 8>}, {pipeline_mode = #tpu.pipeline_mode<synchronous>, transform_indices = @transform_9, window_bounds = array<i64: 9, 128>}, {transform_indices = @transform_10, window_bounds = array<i64: 1, 32, 128>}]} {
    %c0 = arith.constant 0 : index
    %c0_0 = arith.constant 0 : index
    %c0_1 = arith.constant 0 : index
    %0 = vector.load %arg1[%c0, %c0_0, %c0_1] : memref<1x32x128xbf16, #tpu.memory_space<vmem>>, vector<1x32x128xbf16>
    %1 = vector.shape_cast %0 : vector<1x32x128xbf16> to vector<32x128xbf16>
    %c0_2 = arith.constant 0 : index
    %c0_3 = arith.constant 0 : index
    %2 = vector.load %arg2[%c0_2, %c0_3] : memref<128x2xbf16, #tpu.memory_space<vmem>>, vector<128x2xbf16>
    %cst = arith.constant dense<0.000000e+00> : vector<32x2xf32>
    %3 = tpu.matmul %1, %2, %cst {dimension_numbers = #tpu.dot_dimension_numbers<[1], [0], [0], [1], [0, 0, 1, 1], [], []>} : vector<32x128xbf16>, vector<128x2xbf16>, vector<32x2xf32> -> vector<32x2xf32>
    %cst_4 = arith.constant 1.562500e-02 : f32
    %4 = vector.broadcast %cst_4 : f32 to vector<32x2xf32>
    %5 = arith.mulf %3, %4 : vector<32x2xf32>
    %c0_5 = arith.constant 0 : index
    %c0_6 = arith.constant 0 : index
    %6 = vector.load %arg3[%c0_5, %c0_6] : memref<8x32xf32, #tpu.memory_space<vmem>>, vector<8x32xf32>
    %cst_7 = arith.constant dense<0.000000e+00> : vector<8x2xf32>
    %7 = tpu.matmul %6, %5, %cst_7 {dimension_numbers = #tpu.dot_dimension_numbers<[1], [0], [0], [1], [0, 0, 1, 1], [], []>} : vector<8x32xf32>, vector<32x2xf32>, vector<8x2xf32> -> vector<8x2xf32>
    %cst_8 = arith.constant 0.000000e+00 : f32
    %8 = vector.broadcast %cst_8 : f32 to vector<8x2xf32>
    %9 = arith.maximumf %7, %8 : vector<8x2xf32>
    %c0_9 = arith.constant 0 : index
    %c0_10 = arith.constant 0 : index
    %10 = vector.load %arg4[%c0_9, %c0_10] : memref<32x8xf32, #tpu.memory_space<vmem>>, vector<32x8xf32>
    %cst_11 = arith.constant dense<0.000000e+00> : vector<32x2xf32>
    %11 = tpu.matmul %10, %9, %cst_11 {dimension_numbers = #tpu.dot_dimension_numbers<[1], [0], [0], [1], [0, 0, 1, 1], [], []>} : vector<32x8xf32>, vector<8x2xf32>, vector<32x2xf32> -> vector<32x2xf32>
    %12 = arith.negf %11 : vector<32x2xf32>
    %13 = math.exp %12 : vector<32x2xf32>
    %cst_12 = arith.constant 1.000000e+00 : f32
    %14 = vector.broadcast %cst_12 : f32 to vector<32x2xf32>
    %15 = arith.addf %14, %13 : vector<32x2xf32>
    %16 = arith.divf %14, %15 : vector<32x2xf32>
    %17 = vector.extract_strided_slice %1 {offsets = [0, 0], sizes = [32, 64], strides = [1, 1]} : vector<32x128xbf16> to vector<32x64xbf16>
    %18 = arith.extf %17 : vector<32x64xbf16> to vector<32x64xf32>
    %19 = vector.extract_strided_slice %16 {offsets = [0, 0], sizes = [32, 1], strides = [1, 1]} : vector<32x2xf32> to vector<32x1xf32>
    %20 = vector.broadcast %19 : vector<32x1xf32> to vector<32x64xf32>
    %21 = arith.mulf %18, %20 : vector<32x64xf32>
    %c0_13 = arith.constant 0 : index
    %c0_14 = arith.constant 0 : index
    %22 = vector.load %arg12[%c0_13, %c0_14] : memref<32x128xf32, #tpu.memory_space<vmem>>, vector<32x64xf32>
    tpu.vector_store %arg12[%c0_13, %c0_14], %21 {strides = array<i32>} : memref<32x128xf32, #tpu.memory_space<vmem>>, vector<32x64xf32>,
    %23 = vector.extract_strided_slice %1 {offsets = [0, 64], sizes = [32, 64], strides = [1, 1]} : vector<32x128xbf16> to vector<32x64xbf16>
    %24 = arith.extf %23 : vector<32x64xbf16> to vector<32x64xf32>
    %25 = vector.extract_strided_slice %16 {offsets = [0, 1], sizes = [32, 1], strides = [1, 1]} : vector<32x2xf32> to vector<32x1xf32>
    %26 = vector.broadcast %25 : vector<32x1xf32> to vector<32x64xf32>
    %27 = arith.mulf %24, %26 : vector<32x64xf32>
    %c0_15 = arith.constant 0 : index
    %c64 = arith.constant 64 : index
    %28 = vector.load %arg12[%c0_15, %c64] : memref<32x128xf32, #tpu.memory_space<vmem>>, vector<32x64xf32>
    tpu.vector_store %arg12[%c0_15, %c64], %27 {strides = array<i32>} : memref<32x128xf32, #tpu.memory_space<vmem>>, vector<32x64xf32>,
    %c0_16 = arith.constant 0 : index
    %c0_17 = arith.constant 0 : index
    %29 = vector.load %arg12[%c0_16, %c0_17] : memref<32x128xf32, #tpu.memory_space<vmem>>, vector<32x128xf32>
    %c0_18 = arith.constant 0 : index
    %c0_19 = arith.constant 0 : index
    %30 = vector.load %arg5[%c0_18, %c0_19] : memref<8x32xf32, #tpu.memory_space<vmem>>, vector<8x32xf32>
    %cst_20 = arith.constant dense<0.000000e+00> : vector<8x128xf32>
    %31 = tpu.matmul %30, %29, %cst_20 {dimension_numbers = #tpu.dot_dimension_numbers<[1], [0], [0], [1], [0, 0, 1, 1], [], []>} : vector<8x32xf32>, vector<32x128xf32>, vector<8x128xf32> -> vector<8x128xf32>
    %c0_21 = arith.constant 0 : index
    %c0_22 = arith.constant 0 : index
    %32 = vector.load %arg6[%c0_21, %c0_22] : memref<8x1xf32, #tpu.memory_space<vmem>>, vector<8x1xf32>
    %33 = vector.broadcast %32 : vector<8x1xf32> to vector<8x128xf32>
    %34 = arith.addf %31, %33 : vector<8x128xf32>
    %cst_23 = arith.constant 0.000000e+00 : f32
    %35 = vector.broadcast %cst_23 : f32 to vector<8x128xf32>
    %36 = arith.maximumf %34, %35 : vector<8x128xf32>
    %c8_i32 = arith.constant 8 : i32
    %37 = tpu.dynamic_rotate %36 by %c8_i32 dim 1 : vector<8x128xf32>, i32 -> vector<8x128xf32>
    %c120_i32 = arith.constant 120 : i32
    %38 = tpu.dynamic_rotate %36 by %c120_i32 dim 1 : vector<8x128xf32>, i32 -> vector<8x128xf32>
    %c1_i32 = arith.constant 1 : i32
    %39 = tpu.dynamic_rotate %37 by %c1_i32 dim 1 : vector<8x128xf32>, i32 -> vector<8x128xf32>
    %c0_24 = arith.constant 0 : index
    %c0_25 = arith.constant 0 : index
    %40 = vector.load %arg10[%c0_24, %c0_25] : memref<9x128xf32, #tpu.memory_space<vmem>>, vector<1x128xf32>
    %41 = vector.broadcast %40 : vector<1x128xf32> to vector<8x128xf32>
    %42 = arith.mulf %39, %41 : vector<8x128xf32>
    %c0_26 = arith.constant 0 : index
    %c0_27 = arith.constant 0 : index
    %43 = vector.load %arg13[%c0_26, %c0_27] : memref<72x128xf32, #tpu.memory_space<vmem>>, vector<8x128xf32>
    tpu.vector_store %arg13[%c0_26, %c0_27], %42 {strides = array<i32>} : memref<72x128xf32, #tpu.memory_space<vmem>>, vector<8x128xf32>,
    %c1 = arith.constant 1 : index
    %c0_28 = arith.constant 0 : index
    %44 = vector.load %arg10[%c1, %c0_28] : memref<9x128xf32, #tpu.memory_space<vmem>>, vector<1x128xf32>
    %45 = vector.broadcast %44 : vector<1x128xf32> to vector<8x128xf32>
    %46 = arith.mulf %37, %45 : vector<8x128xf32>
    %c8 = arith.constant 8 : index
    %c0_29 = arith.constant 0 : index
    %47 = vector.load %arg13[%c8, %c0_29] : memref<72x128xf32, #tpu.memory_space<vmem>>, vector<8x128xf32>
    tpu.vector_store %arg13[%c8, %c0_29], %46 {strides = array<i32>} : memref<72x128xf32, #tpu.memory_space<vmem>>, vector<8x128xf32>,
    %c127_i32 = arith.constant 127 : i32
    %48 = tpu.dynamic_rotate %37 by %c127_i32 dim 1 : vector<8x128xf32>, i32 -> vector<8x128xf32>
    %c2 = arith.constant 2 : index
    %c0_30 = arith.constant 0 : index
    %49 = vector.load %arg10[%c2, %c0_30] : memref<9x128xf32, #tpu.memory_space<vmem>>, vector<1x128xf32>
    %50 = vector.broadcast %49 : vector<1x128xf32> to vector<8x128xf32>
    %51 = arith.mulf %48, %50 : vector<8x128xf32>
    %c16 = arith.constant 16 : index
    %c0_31 = arith.constant 0 : index
    %52 = vector.load %arg13[%c16, %c0_31] : memref<72x128xf32, #tpu.memory_space<vmem>>, vector<8x128xf32>
    tpu.vector_store %arg13[%c16, %c0_31], %51 {strides = array<i32>} : memref<72x128xf32, #tpu.memory_space<vmem>>, vector<8x128xf32>,
    %c1_i32_32 = arith.constant 1 : i32
    %53 = tpu.dynamic_rotate %36 by %c1_i32_32 dim 1 : vector<8x128xf32>, i32 -> vector<8x128xf32>
    %c3 = arith.constant 3 : index
    %c0_33 = arith.constant 0 : index
    %54 = vector.load %arg10[%c3, %c0_33] : memref<9x128xf32, #tpu.memory_space<vmem>>, vector<1x128xf32>
    %55 = vector.broadcast %54 : vector<1x128xf32> to vector<8x128xf32>
    %56 = arith.mulf %53, %55 : vector<8x128xf32>
    %c24 = arith.constant 24 : index
    %c0_34 = arith.constant 0 : index
    %57 = vector.load %arg13[%c24, %c0_34] : memref<72x128xf32, #tpu.memory_space<vmem>>, vector<8x128xf32>
    tpu.vector_store %arg13[%c24, %c0_34], %56 {strides = array<i32>} : memref<72x128xf32, #tpu.memory_space<vmem>>, vector<8x128xf32>,
    %c4 = arith.constant 4 : index
    %c0_35 = arith.constant 0 : index
    %58 = vector.load %arg10[%c4, %c0_35] : memref<9x128xf32, #tpu.memory_space<vmem>>, vector<1x128xf32>
    %59 = vector.broadcast %58 : vector<1x128xf32> to vector<8x128xf32>
    %60 = arith.mulf %36, %59 : vector<8x128xf32>
    %c32 = arith.constant 32 : index
    %c0_36 = arith.constant 0 : index
    %61 = vector.load %arg13[%c32, %c0_36] : memref<72x128xf32, #tpu.memory_space<vmem>>, vector<8x128xf32>
    tpu.vector_store %arg13[%c32, %c0_36], %60 {strides = array<i32>} : memref<72x128xf32, #tpu.memory_space<vmem>>, vector<8x128xf32>,
    %c127_i32_37 = arith.constant 127 : i32
    %62 = tpu.dynamic_rotate %36 by %c127_i32_37 dim 1 : vector<8x128xf32>, i32 -> vector<8x128xf32>
    %c5 = arith.constant 5 : index
    %c0_38 = arith.constant 0 : index
    %63 = vector.load %arg10[%c5, %c0_38] : memref<9x128xf32, #tpu.memory_space<vmem>>, vector<1x128xf32>
    %64 = vector.broadcast %63 : vector<1x128xf32> to vector<8x128xf32>
    %65 = arith.mulf %62, %64 : vector<8x128xf32>
    %c40 = arith.constant 40 : index
    %c0_39 = arith.constant 0 : index
    %66 = vector.load %arg13[%c40, %c0_39] : memref<72x128xf32, #tpu.memory_space<vmem>>, vector<8x128xf32>
    tpu.vector_store %arg13[%c40, %c0_39], %65 {strides = array<i32>} : memref<72x128xf32, #tpu.memory_space<vmem>>, vector<8x128xf32>,
    %c1_i32_40 = arith.constant 1 : i32
    %67 = tpu.dynamic_rotate %38 by %c1_i32_40 dim 1 : vector<8x128xf32>, i32 -> vector<8x128xf32>
    %c6 = arith.constant 6 : index
    %c0_41 = arith.constant 0 : index
    %68 = vector.load %arg10[%c6, %c0_41] : memref<9x128xf32, #tpu.memory_space<vmem>>, vector<1x128xf32>
    %69 = vector.broadcast %68 : vector<1x128xf32> to vector<8x128xf32>
    %70 = arith.mulf %67, %69 : vector<8x128xf32>
    %c48 = arith.constant 48 : index
    %c0_42 = arith.constant 0 : index
    %71 = vector.load %arg13[%c48, %c0_42] : memref<72x128xf32, #tpu.memory_space<vmem>>, vector<8x128xf32>
    tpu.vector_store %arg13[%c48, %c0_42], %70 {strides = array<i32>} : memref<72x128xf32, #tpu.memory_space<vmem>>, vector<8x128xf32>,
    %c7 = arith.constant 7 : index
    %c0_43 = arith.constant 0 : index
    %72 = vector.load %arg10[%c7, %c0_43] : memref<9x128xf32, #tpu.memory_space<vmem>>, vector<1x128xf32>
    %73 = vector.broadcast %72 : vector<1x128xf32> to vector<8x128xf32>
    %74 = arith.mulf %38, %73 : vector<8x128xf32>
    %c56 = arith.constant 56 : index
    %c0_44 = arith.constant 0 : index
    %75 = vector.load %arg13[%c56, %c0_44] : memref<72x128xf32, #tpu.memory_space<vmem>>, vector<8x128xf32>
    tpu.vector_store %arg13[%c56, %c0_44], %74 {strides = array<i32>} : memref<72x128xf32, #tpu.memory_space<vmem>>, vector<8x128xf32>,
    %c127_i32_45 = arith.constant 127 : i32
    %76 = tpu.dynamic_rotate %38 by %c127_i32_45 dim 1 : vector<8x128xf32>, i32 -> vector<8x128xf32>
    %c8_46 = arith.constant 8 : index
    %c0_47 = arith.constant 0 : index
    %77 = vector.load %arg10[%c8_46, %c0_47] : memref<9x128xf32, #tpu.memory_space<vmem>>, vector<1x128xf32>
    %78 = vector.broadcast %77 : vector<1x128xf32> to vector<8x128xf32>
    %79 = arith.mulf %76, %78 : vector<8x128xf32>
    %c64_48 = arith.constant 64 : index
    %c0_49 = arith.constant 0 : index
    %80 = vector.load %arg13[%c64_48, %c0_49] : memref<72x128xf32, #tpu.memory_space<vmem>>, vector<8x128xf32>
    tpu.vector_store %arg13[%c64_48, %c0_49], %79 {strides = array<i32>} : memref<72x128xf32, #tpu.memory_space<vmem>>, vector<8x128xf32>,
    %c0_50 = arith.constant 0 : index
    %c0_51 = arith.constant 0 : index
    %81 = vector.load %arg7[%c0_50, %c0_51] : memref<8x72xf32, #tpu.memory_space<vmem>>, vector<8x72xf32>
    %c0_52 = arith.constant 0 : index
    %c0_53 = arith.constant 0 : index
    %82 = vector.load %arg13[%c0_52, %c0_53] : memref<72x128xf32, #tpu.memory_space<vmem>>, vector<72x128xf32>
    %cst_54 = arith.constant dense<0.000000e+00> : vector<8x128xf32>
    %83 = tpu.matmul %81, %82, %cst_54 {dimension_numbers = #tpu.dot_dimension_numbers<[1], [0], [0], [1], [0, 0, 1, 1], [], []>} : vector<8x72xf32>, vector<72x128xf32>, vector<8x128xf32> -> vector<8x128xf32>
    %c0_55 = arith.constant 0 : index
    %c0_56 = arith.constant 0 : index
    %84 = vector.load %arg8[%c0_55, %c0_56] : memref<8x1xf32, #tpu.memory_space<vmem>>, vector<8x1xf32>
    %85 = vector.broadcast %84 : vector<8x1xf32> to vector<8x128xf32>
    %86 = arith.addf %83, %85 : vector<8x128xf32>
    %cst_57 = arith.constant 0.000000e+00 : f32
    %87 = vector.broadcast %cst_57 : f32 to vector<8x128xf32>
    %88 = arith.maximumf %86, %87 : vector<8x128xf32>
    %c0_58 = arith.constant 0 : index
    %c0_59 = arith.constant 0 : index
    %89 = vector.load %arg9[%c0_58, %c0_59] : memref<1x8xf32, #tpu.memory_space<vmem>>, vector<1x8xf32>
    %cst_60 = arith.constant dense<0.000000e+00> : vector<1x128xf32>
    %90 = tpu.matmul %89, %88, %cst_60 {dimension_numbers = #tpu.dot_dimension_numbers<[1], [0], [0], [1], [0, 0, 1, 1], [], []>} : vector<1x8xf32>, vector<8x128xf32>, vector<1x128xf32> -> vector<1x128xf32>
    %91 = arith.negf %90 : vector<1x128xf32>
    %92 = math.exp %91 : vector<1x128xf32>
    %cst_61 = arith.constant 1.000000e+00 : f32
    %93 = vector.broadcast %cst_61 : f32 to vector<1x128xf32>
    %94 = arith.addf %93, %92 : vector<1x128xf32>
    %95 = arith.divf %93, %94 : vector<1x128xf32>
    %96 = vector.broadcast %95 : vector<1x128xf32> to vector<32x128xf32>
    %97 = arith.mulf %29, %96 : vector<32x128xf32>
    %98 = arith.truncf %97 : vector<32x128xf32> to vector<32x128xbf16>
    %c0_62 = arith.constant 0 : index
    %c0_63 = arith.constant 0 : index
    %c0_64 = arith.constant 0 : index
    %99 = vector.load %arg11[%c0_62, %c0_63, %c0_64] : memref<1x32x128xbf16, #tpu.memory_space<vmem>>, vector<1x32x128xbf16>
    %100 = vector.shape_cast %99 : vector<1x32x128xbf16> to vector<32x128xbf16>
    %101 = vector.shape_cast %98 : vector<32x128xbf16> to vector<1x32x128xbf16>
    tpu.vector_store %arg11[%c0_62, %c0_63, %c0_64], %101 {strides = array<i32>} : memref<1x32x128xbf16, #tpu.memory_space<vmem>>, vector<1x32x128xbf16>,
    return
  }
  func.func @transform_0(%arg0: i32) -> (i32, i32, i32) {
    %c0_i32 = arith.constant 0 : i32
    %c0_i32_0 = arith.constant 0 : i32
    %c0_i32_1 = arith.constant 0 : i32
    return %arg0, %c0_i32, %c0_i32_0 : i32, i32, i32
  }
  func.func @transform_1(%arg0: i32) -> (i32, i32) {
    %c0_i32 = arith.constant 0 : i32
    %c0_i32_0 = arith.constant 0 : i32
    %c0_i32_1 = arith.constant 0 : i32
    return %c0_i32, %c0_i32_0 : i32, i32
  }
  func.func @transform_2(%arg0: i32) -> (i32, i32) {
    %c0_i32 = arith.constant 0 : i32
    %c0_i32_0 = arith.constant 0 : i32
    %c0_i32_1 = arith.constant 0 : i32
    return %c0_i32, %c0_i32_0 : i32, i32
  }
  func.func @transform_3(%arg0: i32) -> (i32, i32) {
    %c0_i32 = arith.constant 0 : i32
    %c0_i32_0 = arith.constant 0 : i32
    %c0_i32_1 = arith.constant 0 : i32
    return %c0_i32, %c0_i32_0 : i32, i32
  }
  func.func @transform_4(%arg0: i32) -> (i32, i32) {
    %c0_i32 = arith.constant 0 : i32
    %c0_i32_0 = arith.constant 0 : i32
    %c0_i32_1 = arith.constant 0 : i32
    return %c0_i32, %c0_i32_0 : i32, i32
  }
  func.func @transform_5(%arg0: i32) -> (i32, i32) {
    %c0_i32 = arith.constant 0 : i32
    %c0_i32_0 = arith.constant 0 : i32
    %c0_i32_1 = arith.constant 0 : i32
    return %c0_i32, %c0_i32_0 : i32, i32
  }
  func.func @transform_6(%arg0: i32) -> (i32, i32) {
    %c0_i32 = arith.constant 0 : i32
    %c0_i32_0 = arith.constant 0 : i32
    %c0_i32_1 = arith.constant 0 : i32
    return %c0_i32, %c0_i32_0 : i32, i32
  }
  func.func @transform_7(%arg0: i32) -> (i32, i32) {
    %c0_i32 = arith.constant 0 : i32
    %c0_i32_0 = arith.constant 0 : i32
    %c0_i32_1 = arith.constant 0 : i32
    return %c0_i32, %c0_i32_0 : i32, i32
  }
  func.func @transform_8(%arg0: i32) -> (i32, i32) {
    %c0_i32 = arith.constant 0 : i32
    %c0_i32_0 = arith.constant 0 : i32
    %c0_i32_1 = arith.constant 0 : i32
    return %c0_i32, %c0_i32_0 : i32, i32
  }
  func.func @transform_9(%arg0: i32) -> (i32, i32) {
    %c0_i32 = arith.constant 0 : i32
    %c0_i32_0 = arith.constant 0 : i32
    %c0_i32_1 = arith.constant 0 : i32
    return %c0_i32, %c0_i32_0 : i32, i32
  }
  func.func @transform_10(%arg0: i32) -> (i32, i32, i32) {
    %c0_i32 = arith.constant 0 : i32
    %c0_i32_0 = arith.constant 0 : i32
    %c0_i32_1 = arith.constant 0 : i32
    return %arg0, %c0_i32, %c0_i32_0 : i32, i32, i32
  }
}

</mosaic_0001>

<llo_original>
// kernel: tpu_custom_call.1
$region0: #{tpu_custom_call.1}
  #allocation0 [shape = 'u32[]', space=smem, size = 0x4, offset = 0x4, fixed_abs, tag = 'smem constant byte address 0x4 - core index']
  #allocation1 [shape = 'u32[144,128]{1,0:T(1,128)}', space=vmem, size = 0x12000, scoped, tag = 'internal scratch']
  #allocation2 [shape = 'f32[32,128]{1,0:T(8,128)}', space=vmem, size = 0x4000, scoped, tag = 'scratch operand']
  #allocation3 [shape = 'f32[72,128]{1,0:T(8,128)}', space=vmem, size = 0x9000, scoped, tag = 'scratch operand']
  %s0 = inlined_call_operand.vmem [shape: bf16[1,32,128], index: 0, kind: input, shape index: {}]
  %s1 = inlined_call_operand.vmem [shape: bf16[128,2], index: 1, kind: input, shape index: {}]
  %s2 = inlined_call_operand.vmem [shape: f32[8,32], index: 2, kind: input, shape index: {}]
  %s3 = inlined_call_operand.vmem [shape: f32[32,8], index: 3, kind: input, shape index: {}]
  %s4 = inlined_call_operand.vmem [shape: f32[8,32], index: 4, kind: input, shape index: {}]
  %s5 = inlined_call_operand.vmem [shape: f32[8,1], index: 5, kind: input, shape index: {}]
  %s6 = inlined_call_operand.vmem [shape: f32[8,72], index: 6, kind: input, shape index: {}]
  %s7 = inlined_call_operand.vmem [shape: f32[8,1], index: 7, kind: input, shape index: {}]
  %s8 = inlined_call_operand.vmem [shape: f32[1,8], index: 8, kind: input, shape index: {}]
  %s9 = inlined_call_operand.vmem [shape: f32[9,128], index: 9, kind: input, shape index: {}]
  %s10 = inlined_call_operand.hbm [shape: bf16[1,32,128], index: 10, kind: output, shape index: {}]
  %s11 = sld [smem:[#allocation0]]
  $region50: #{tpu_custom_call.1} parent=0
    _
  %s13 = ssub.s32 1, %s11
  %s14 = scalar_select 0, %s13, %s11
  $region1: #{tpu_custom_call.1} parent=0
    #allocation4 [shape = 'u8[8192]{0}', space=vmem, size = 0x2000, scoped, tag = 'output window, operand 0, single buffered']
    #allocation5 [shape = 's32[1]{0}', space=sflag, size = 0x4, scoped, tag = 'scoped memory for tpu_custom_call.1']
    %15 = vsyncpa [#allocation5], 0
    // Predicated region
    $region2: #{tpu_custom_call.1} parent=1 // pred_check
      _
    $region3: #{tpu_custom_call.1} parent=1 // pred_check_branch
      %17 = sbr.rel (0) target = $region5
    $region4: #{tpu_custom_call.1} parent=1 // pred_region
      _
    $region5: #{tpu_custom_call.1} parent=1 // pred_fallthru
      _
    // Predicated region
    $region6: #{tpu_custom_call.1} parent=1 // pred_check
      _
    $region7: #{tpu_custom_call.1} parent=1 // pred_check_branch
      %19 = sbr.rel (0) target = $region9
    $region8: #{tpu_custom_call.1} parent=1 // pred_region
      _
    $region9: #{tpu_custom_call.1} parent=1 // pred_fallthru
      _
    // Predicated region
    $region10: #{tpu_custom_call.1} parent=1 // pred_check
      _
    $region11: #{tpu_custom_call.1} parent=1 // pred_check_branch
      %21 = sbr.rel (0) target = $region13
    $region12: #{tpu_custom_call.1} parent=1 // pred_region
      _
    $region13: #{tpu_custom_call.1} parent=1 // pred_fallthru
      _
    // Predicated region
    $region14: #{tpu_custom_call.1} parent=1 // pred_check
      _
    $region15: #{tpu_custom_call.1} parent=1 // pred_check_branch
      %23 = sbr.rel (0) target = $region17
    $region16: #{tpu_custom_call.1} parent=1 // pred_region
      _
    $region17: #{tpu_custom_call.1} parent=1 // pred_fallthru
      _
    // Predicated region
    $region18: #{tpu_custom_call.1} parent=1 // pred_check
      _
    $region19: #{tpu_custom_call.1} parent=1 // pred_check_branch
      %25 = sbr.rel (0) target = $region21
    $region20: #{tpu_custom_call.1} parent=1 // pred_region
      _
    $region21: #{tpu_custom_call.1} parent=1 // pred_fallthru
      _
    // Predicated region
    $region22: #{tpu_custom_call.1} parent=1 // pred_check
      _
    $region23: #{tpu_custom_call.1} parent=1 // pred_check_branch
      %27 = sbr.rel (0) target = $region25
    $region24: #{tpu_custom_call.1} parent=1 // pred_region
      _
    $region25: #{tpu_custom_call.1} parent=1 // pred_fallthru
      _
    // Predicated region
    $region26: #{tpu_custom_call.1} parent=1 // pred_check
      _
    $region27: #{tpu_custom_call.1} parent=1 // pred_check_branch
      %29 = sbr.rel (0) target = $region29
    $region28: #{tpu_custom_call.1} parent=1 // pred_region
      _
    $region29: #{tpu_custom_call.1} parent=1 // pred_fallthru
      _
    // Predicated region
    $region30: #{tpu_custom_call.1} parent=1 // pred_check
      _
    $region31: #{tpu_custom_call.1} parent=1 // pred_check_branch
      %31 = sbr.rel (0) target = $region33
    $region32: #{tpu_custom_call.1} parent=1 // pred_region
      _
    $region33: #{tpu_custom_call.1} parent=1 // pred_fallthru
      _
    // Predicated region
    $region34: #{tpu_custom_call.1} parent=1 // pred_check
      _
    $region35: #{tpu_custom_call.1} parent=1 // pred_check_branch
      %33 = sbr.rel (0) target = $region37
    $region36: #{tpu_custom_call.1} parent=1 // pred_region
      _
    $region37: #{tpu_custom_call.1} parent=1 // pred_fallthru
      _
    // Predicated region
    $region38: #{tpu_custom_call.1} parent=1 // pred_check
      _
    $region39: #{tpu_custom_call.1} parent=1 // pred_check_branch
      %35 = sbr.rel (0) target = $region41
    $region40: #{tpu_custom_call.1} parent=1 // pred_region
      _
    $region41: #{tpu_custom_call.1} parent=1 // pred_fallthru
      _
    %v37 = vld [vmem:[%s0] sm:$0xf]
    %v38 = vld [vmem:[%s0 + $0x4] sm:$0xf]
    %v39 = vld [vmem:[%s0 + $0x8] sm:$0xf]
    %v40 = vld [vmem:[%s0 + $0xc] sm:$0xf]
    %v41 = vld [vmem:[%s1] sm:$0xf]
    %v42 = vld [vmem:[%s1 + $0x4] sm:$0xf]
    %v43 = vld [vmem:[%s1 + $0x8] sm:$0xf]
    %v44 = vld [vmem:[%s1 + $0xc] sm:$0xf]
    %v45 = vld [vmem:[%s1 + $0x10] sm:$0xf]
    %v46 = vld [vmem:[%s1 + $0x14] sm:$0xf]
    %v47 = vld [vmem:[%s1 + $0x18] sm:$0xf]
    %v48 = vld [vmem:[%s1 + $0x1c] sm:$0xf]
    %v49 = vld [vmem:[%s1 + $0x20] sm:$0xf]
    %v50 = vld [vmem:[%s1 + $0x24] sm:$0xf]
    %v51 = vld [vmem:[%s1 + $0x28] sm:$0xf]
    %v52 = vld [vmem:[%s1 + $0x2c] sm:$0xf]
    %v53 = vld [vmem:[%s1 + $0x30] sm:$0xf]
    %v54 = vld [vmem:[%s1 + $0x34] sm:$0xf]
    %v55 = vld [vmem:[%s1 + $0x38] sm:$0xf]
    %v56 = vld [vmem:[%s1 + $0x3c] sm:$0xf]
    %v61 = vunpack.c.l.b16 %v37
    %v62 = vunpack.c.l.b16 %v38
    %v63 = vunpack.c.l.b16 %v39
    %v64 = vunpack.c.l.b16 %v40
    %v65 = vpack.c.b16 %v62, %v61
    %v66 = vpack.c.b16 %v64, %v63
    %v85 = vunpack.c.l.b16 %v41
    %v86 = vunpack.c.l.b16 %v42
    %v87 = vunpack.c.l.b16 %v43
    %v88 = vunpack.c.l.b16 %v44
    %v89 = vunpack.c.l.b16 %v45
    %v90 = vunpack.c.l.b16 %v46
    %v91 = vunpack.c.l.b16 %v47
    %v92 = vunpack.c.l.b16 %v48
    %v93 = vunpack.c.l.b16 %v49
    %v94 = vunpack.c.l.b16 %v50
    %v95 = vunpack.c.l.b16 %v51
    %v96 = vunpack.c.l.b16 %v52
    %v97 = vunpack.c.l.b16 %v53
    %v98 = vunpack.c.l.b16 %v54
    %v99 = vunpack.c.l.b16 %v55
    %v100 = vunpack.c.l.b16 %v56
    %v101 = vpack.c.b16 %v86, %v85
    %v102 = vpack.c.b16 %v88, %v87
    %v103 = vpack.c.b16 %v90, %v89
    %v104 = vpack.c.b16 %v92, %v91
    %v105 = vpack.c.b16 %v94, %v93
    %v106 = vpack.c.b16 %v96, %v95
    %v107 = vpack.c.b16 %v98, %v97
    %v108 = vpack.c.b16 %v100, %v99
    %117 = vmatprep.subr.bf16.mxu0 0
    %118 = vmatpush1.bf16.msra.mxu0 %v108
    %119 = vmatprep.subr.bf16.mxu0 0
    %120 = vmatpush1.bf16.msra.mxu0 %v107
    %121 = vmatprep.subr.bf16.mxu0 0
    %122 = vmatpush1.bf16.msra.mxu0 %v106
    %123 = vmatprep.subr.bf16.mxu0 0
    %124 = vmatpush1.bf16.msra.mxu0 %v105
    %125 = vmatprep.subr.bf16.mxu0 0
    %126 = vmatpush1.bf16.msra.mxu0 %v104
    %127 = vmatprep.subr.bf16.mxu0 0
    %128 = vmatpush1.bf16.msra.mxu0 %v103
    %129 = vmatprep.subr.bf16.mxu0 0
    %130 = vmatpush1.bf16.msra.mxu0 %v102
    %131 = vmatprep.subr.bf16.mxu0 0
    %132 = vmatpush1.bf16.msra.mxu0 %v101
    %133 = vmatprep.subr.bf16.mxu0 0
    %134 = vmatpush2.bf16.msra.mxu0 0
    %135 = vmatprep.subr.bf16.mxu0 0
    %136 = vmatpush2.bf16.msra.mxu0 0
    %137 = vmatprep.subr.bf16.mxu0 0
    %138 = vmatpush2.bf16.msra.mxu0 0
    %139 = vmatprep.subr.bf16.mxu0 0
    %140 = vmatpush2.bf16.msra.mxu0 0
    %141 = vmatprep.subr.bf16.mxu0 0
    %142 = vmatpush2.bf16.msra.mxu0 0
    %143 = vmatprep.subr.bf16.mxu0 0
    %144 = vmatpush2.bf16.msra.mxu0 0
    %145 = vmatprep.subr.bf16.mxu0 0
    %146 = vmatpush2.bf16.msra.mxu0 0
    %147 = vmatprep.subr.bf16.mxu0 0
    %148 = vmatpush2.bf16.msra.mxu0 0
    %149 = vmatprep.mubr.bf16.mxu0 0
    %150 = vmatmul.mubr.bf16.gmra.mxu0 %v65
    %v151 = vpop.f32.mrf.mxu0
    %v152 = vadd.f32 0.0, %v151
    %v153 = vpop.f32.mrf.mxu0
    %v154 = vpop.f32.mrf.mxu0
    %v155 = vadd.f32 0.0, %v154
    %v156 = vpop.f32.mrf.mxu0
    %157 = vmatprep.mubr.bf16.mxu0 0
    %158 = vmatmul.mubr.bf16.gmra.mxu0 %v66
    %v159 = vpop.f32.mrf.mxu0
    %v160 = vadd.f32 0.0, %v159
    %v161 = vpop.f32.mrf.mxu0
    %v162 = vpop.f32.mrf.mxu0
    %v163 = vadd.f32 0.0, %v162
    %v164 = vpop.f32.mrf.mxu0
    %165 = vdwg.mxu0
    %v166 = vmul.f32 %v152, 0.015625
    %v167 = vmul.f32 %v155, 0.015625
    %v168 = vmul.f32 %v160, 0.015625
    %v169 = vmul.f32 %v163, 0.015625
    %v170 = vld [vmem:[%s2] sm:$0xff]
    %vm171 = vcmask 261120
    %v173 = vsel %vm171, %v170, 0
    %175 = vmatprep.subr.mxu0 0.0
    %176 = vmatpush1.msra.mxu0 0.0
    %177 = vmatprep.subr.mxu0 0.0
    %178 = vmatpush1.msra.mxu0 0.0
    %179 = vmatprep.subr.mxu0 0.0
    %180 = vmatpush1.msra.mxu0 0.0
    %181 = vmatprep.subr.mxu0 0.0
    %182 = vmatpush1.msra.mxu0 0.0
    %183 = vmatprep.subr.mxu0 0.0
    %184 = vmatpush1.msra.mxu0 0.0
    %185 = vmatprep.subr.mxu0 0.0
    %186 = vmatpush1.msra.mxu0 0.0
    %187 = vmatprep.subr.mxu0 0.0
    %188 = vmatpush1.msra.mxu0 0.0
    %189 = vmatprep.subr.mxu0 0.0
    %190 = vmatpush1.msra.mxu0 0.0
    %191 = vmatprep.subr.mxu0 0.0
    %192 = vmatpush1.msra.mxu0 0.0
    %193 = vmatprep.subr.mxu0 0.0
    %194 = vmatpush1.msra.mxu0 0.0
    %195 = vmatprep.subr.mxu0 0.0
    %196 = vmatpush1.msra.mxu0 0.0
    %197 = vmatprep.subr.mxu0 0.0
    %198 = vmatpush1.msra.mxu0 0.0
    %199 = vmatprep.subr.mxu0 0.0
    %200 = vmatpush1.msra.mxu0 %v169
    %201 = vmatprep.subr.mxu0 0.0
    %202 = vmatpush1.msra.mxu0 %v168
    %203 = vmatprep.subr.mxu0 0.0
    %204 = vmatpush1.msra.mxu0 %v167
    %205 = vmatprep.subr.mxu0 0.0
    %206 = vmatpush1.msra.mxu0 %v166
    %207 = vmatprep.subr.mxu0 0.0
    %208 = vmatpush2.msra.mxu0 0.0
    %209 = vmatprep.subr.mxu0 0.0
    %210 = vmatpush2.msra.mxu0 0.0
    %211 = vmatprep.subr.mxu0 0.0
    %212 = vmatpush2.msra.mxu0 0.0
    %213 = vmatprep.subr.mxu0 0.0
    %214 = vmatpush2.msra.mxu0 0.0
    %215 = vmatprep.subr.mxu0 0.0
    %216 = vmatpush2.msra.mxu0 0.0
    %217 = vmatprep.subr.mxu0 0.0
    %218 = vmatpush2.msra.mxu0 0.0
    %219 = vmatprep.subr.mxu0 0.0
    %220 = vmatpush2.msra.mxu0 0.0
    %221 = vmatprep.subr.mxu0 0.0
    %222 = vmatpush2.msra.mxu0 0.0
    %223 = vmatprep.subr.mxu0 0.0
    %224 = vmatpush2.msra.mxu0 0.0
    %225 = vmatprep.subr.mxu0 0.0
    %226 = vmatpush2.msra.mxu0 0.0
    %227 = vmatprep.subr.mxu0 0.0
    %228 = vmatpush2.msra.mxu0 0.0
    %229 = vmatprep.subr.mxu0 0.0
    %230 = vmatpush2.msra.mxu0 0.0
    %231 = vmatprep.subr.mxu0 0.0
    %232 = vmatpush2.msra.mxu0 0.0
    %233 = vmatprep.subr.mxu0 0.0
    %234 = vmatpush2.msra.mxu0 0.0
    %235 = vmatprep.subr.mxu0 0.0
    %236 = vmatpush2.msra.mxu0 0.0
    %237 = vmatprep.subr.mxu0 0.0
    %238 = vmatpush2.msra.mxu0 0.0
    %239 = vmatprep.mubr.f32.mxu0 0.0
    %240 = vmatmul.mubr.f32.gmra.mxu0 %v173
    %v241 = vpop.f32.mrf.mxu0
    %v242 = vadd.f32 0.0, %v241
    %v243 = vpop.f32.mrf.mxu0
    %244 = vdwg.mxu0
    %v245 = vmax.f32 %v242, 0.0
    %v246 = vld [vmem:[%s3] sm:$0xff]
    %v247 = vld [vmem:[%s3 + $0x8] sm:$0xff]
    %v248 = vld [vmem:[%s3 + $0x10] sm:$0xff]
    %v249 = vld [vmem:[%s3 + $0x18] sm:$0xff]
    %vm250 = vcmask 64512
    %v252 = vsel %vm250, %v246, 0
    %v255 = vsel %vm250, %v247, 0
    %v258 = vsel %vm250, %v248, 0
    %v261 = vsel %vm250, %v249, 0
    %263 = vmatprep.subr.mxu0 0.0
    %264 = vmatpush1.msra.mxu0 0.0
    %265 = vmatprep.subr.mxu0 0.0
    %266 = vmatpush1.msra.mxu0 0.0
    %267 = vmatprep.subr.mxu0 0.0
    %268 = vmatpush1.msra.mxu0 0.0
    %269 = vmatprep.subr.mxu0 0.0
    %270 = vmatpush1.msra.mxu0 0.0
    %271 = vmatprep.subr.mxu0 0.0
    %272 = vmatpush1.msra.mxu0 0.0
    %273 = vmatprep.subr.mxu0 0.0
    %274 = vmatpush1.msra.mxu0 0.0
    %275 = vmatprep.subr.mxu0 0.0
    %276 = vmatpush1.msra.mxu0 0.0
    %277 = vmatprep.subr.mxu0 0.0
    %278 = vmatpush1.msra.mxu0 0.0
    %279 = vmatprep.subr.mxu0 0.0
    %280 = vmatpush1.msra.mxu0 0.0
    %281 = vmatprep.subr.mxu0 0.0
    %282 = vmatpush1.msra.mxu0 0.0
    %283 = vmatprep.subr.mxu0 0.0
    %284 = vmatpush1.msra.mxu0 0.0
    %285 = vmatprep.subr.mxu0 0.0
    %286 = vmatpush1.msra.mxu0 0.0
    %287 = vmatprep.subr.mxu0 0.0
    %288 = vmatpush1.msra.mxu0 0.0
    %289 = vmatprep.subr.mxu0 0.0
    %290 = vmatpush1.msra.mxu0 0.0
    %291 = vmatprep.subr.mxu0 0.0
    %292 = vmatpush1.msra.mxu0 0.0
    %293 = vmatprep.subr.mxu0 0.0
    %294 = vmatpush1.msra.mxu0 %v245
    %295 = vmatprep.subr.mxu0 0.0
    %296 = vmatpush2.msra.mxu0 0.0
    %297 = vmatprep.subr.mxu0 0.0
    %298 = vmatpush2.msra.mxu0 0.0
    %299 = vmatprep.subr.mxu0 0.0
    %300 = vmatpush2.msra.mxu0 0.0
    %301 = vmatprep.subr.mxu0 0.0
    %302 = vmatpush2.msra.mxu0 0.0
    %303 = vmatprep.subr.mxu0 0.0
    %304 = vmatpush2.msra.mxu0 0.0
    %305 = vmatprep.subr.mxu0 0.0
    %306 = vmatpush2.msra.mxu0 0.0
    %307 = vmatprep.subr.mxu0 0.0
    %308 = vmatpush2.msra.mxu0 0.0
    %309 = vmatprep.subr.mxu0 0.0
    %310 = vmatpush2.msra.mxu0 0.0
    %311 = vmatprep.subr.mxu0 0.0
    %312 = vmatpush2.msra.mxu0 0.0
    %313 = vmatprep.subr.mxu0 0.0
    %314 = vmatpush2.msra.mxu0 0.0
    %315 = vmatprep.subr.mxu0 0.0
    %316 = vmatpush2.msra.mxu0 0.0
    %317 = vmatprep.subr.mxu0 0.0
    %318 = vmatpush2.msra.mxu0 0.0
    %319 = vmatprep.subr.mxu0 0.0
    %320 = vmatpush2.msra.mxu0 0.0
    %321 = vmatprep.subr.mxu0 0.0
    %322 = vmatpush2.msra.mxu0 0.0
    %323 = vmatprep.subr.mxu0 0.0
    %324 = vmatpush2.msra.mxu0 0.0
    %325 = vmatprep.subr.mxu0 0.0
    %326 = vmatpush2.msra.mxu0 0.0
    %327 = vmatprep.mubr.f32.mxu0 0.0
    %328 = vmatmul.mubr.f32.gmra.mxu0 %v252
    %v329 = vpop.f32.mrf.mxu0
    %v330 = vadd.f32 0.0, %v329
    %v331 = vpop.f32.mrf.mxu0
    %332 = vmatprep.mubr.f32.mxu0 0.0
    %333 = vmatmul.mubr.f32.gmra.mxu0 %v255
    %v334 = vpop.f32.mrf.mxu0
    %v335 = vadd.f32 0.0, %v334
    %v336 = vpop.f32.mrf.mxu0
    %337 = vmatprep.mubr.f32.mxu0 0.0
    %338 = vmatmul.mubr.f32.gmra.mxu0 %v258
    %v339 = vpop.f32.mrf.mxu0
    %v340 = vadd.f32 0.0, %v339
    %v341 = vpop.f32.mrf.mxu0
    %342 = vmatprep.mubr.f32.mxu0 0.0
    %343 = vmatmul.mubr.f32.gmra.mxu0 %v261
    %v344 = vpop.f32.mrf.mxu0
    %v345 = vadd.f32 0.0, %v344
    %v346 = vpop.f32.mrf.mxu0
    %347 = vdwg.mxu0
    %v348 = vxor.u32 %v330, 2147483648
    %v349 = vxor.u32 %v335, 2147483648
    %v350 = vxor.u32 %v340, 2147483648
    %v351 = vxor.u32 %v345, 2147483648
    %v352 = vmul.f32 %v348, 1.442695
    %v353 = vpow.pop %v352
    %v354 = vmul.f32 %v349, 1.442695
    %v355 = vpow.pop %v354
    %v356 = vmul.f32 %v350, 1.442695
    %v357 = vpow.pop %v356
    %v358 = vmul.f32 %v351, 1.442695
    %v359 = vpow.pop %v358
    %v360 = vadd.f32 %v353, 1.0
    %v361 = vadd.f32 %v355, 1.0
    %v362 = vadd.f32 %v357, 1.0
    %v363 = vadd.f32 %v359, 1.0
    %v364 = vrcp.pop %v360
    %v365 = vmul.f32 1.0, %v364
    %v366 = vrcp.pop %v361
    %v367 = vmul.f32 1.0, %v366
    %v368 = vrcp.pop %v362
    %v369 = vmul.f32 1.0, %v368
    %v370 = vrcp.pop %v363
    %v371 = vmul.f32 1.0, %v370
    %v372 = vunpack.c.l.bf16 %v37
    %v373 = vunpack.c.l.bf16 %v38
    %v374 = vunpack.c.l.bf16 %v39
    %v375 = vunpack.c.l.bf16 %v40
    %377 = vset.pattern.permute.xlu0 0
    %378 = vperm.xlu0 %377, %v365
    %v379 = vpop.permute.xlu0 %378
    %382 = vset.pattern.permute.xlu0 0
    %383 = vperm.xlu0 %382, %v367
    %v384 = vpop.permute.xlu0 %383
    %387 = vset.pattern.permute.xlu0 0
    %388 = vperm.xlu0 %387, %v369
    %v389 = vpop.permute.xlu0 %388
    %392 = vset.pattern.permute.xlu0 0
    %393 = vperm.xlu0 %392, %v371
    %v394 = vpop.permute.xlu0 %393
    %v396 = vmul.f32 %v372, %v379
    %v397 = vmul.f32 %v373, %v384
    %v398 = vmul.f32 %v374, %v389
    %v399 = vmul.f32 %v375, %v394
    %vm400 = vcmask 523264
    %401 = vst.msk [vmem:[#allocation2] sm:$0xff] %vm400, %v396
    %402 = vst.msk [vmem:[#allocation2 + $0x8] sm:$0xff] %vm400, %v397
    %403 = vst.msk [vmem:[#allocation2 + $0x10] sm:$0xff] %vm400, %v398
    %404 = vst.msk [vmem:[#allocation2 + $0x18] sm:$0xff] %vm400, %v399
    %405 = vset.pattern.permute.xlu0 1
    %406 = vperm.xlu0 %405, %v365
    %v407 = vpop.permute.xlu0 %406
    %409 = vset.pattern.permute.xlu0 1
    %410 = vperm.xlu0 %409, %v367
    %v411 = vpop.permute.xlu0 %410
    %413 = vset.pattern.permute.xlu0 1
    %414 = vperm.xlu0 %413, %v369
    %v415 = vpop.permute.xlu0 %414
    %417 = vset.pattern.permute.xlu0 1
    %418 = vperm.xlu0 %417, %v371
    %v419 = vpop.permute.xlu0 %418
    %v421 = vmul.f32 %v372, %v407
    %v422 = vmul.f32 %v373, %v411
    %v423 = vmul.f32 %v374, %v415
    %v424 = vmul.f32 %v375, %v419
    %vm425 = vcmask 1048064
    %426 = vst.msk [vmem:[#allocation2] sm:$0xff] %vm425, %v421
    %427 = vst.msk [vmem:[#allocation2 + $0x8] sm:$0xff] %vm425, %v422
    %428 = vst.msk [vmem:[#allocation2 + $0x10] sm:$0xff] %vm425, %v423
    %429 = vst.msk [vmem:[#allocation2 + $0x18] sm:$0xff] %vm425, %v424
    %v430 = vld [vmem:[#allocation2] sm:$0xff]
    %v431 = vld [vmem:[#allocation2 + $0x8] sm:$0xff]
    %v432 = vld [vmem:[#allocation2 + $0x10] sm:$0xff]
    %v433 = vld [vmem:[#allocation2 + $0x18] sm:$0xff]
    %v434 = vld [vmem:[%s4] sm:$0xff]
    %v435 = vld [vmem:[%s5] sm:$0xff]
    %437 = vset.pattern.permute.xlu0 0
    %438 = vperm.xlu0 %437, %v435
    %v439 = vpop.permute.xlu0 %438
    %v442 = vsel %vm171, %v434, 0
    %444 = vmatprep.subr.mxu0 0.0
    %445 = vmatpush1.msra.mxu0 0.0
    %446 = vmatprep.subr.mxu0 0.0
    %447 = vmatpush1.msra.mxu0 0.0
    %448 = vmatprep.subr.mxu0 0.0
    %449 = vmatpush1.msra.mxu0 0.0
    %450 = vmatprep.subr.mxu0 0.0
    %451 = vmatpush1.msra.mxu0 0.0
    %452 = vmatprep.subr.mxu0 0.0
    %453 = vmatpush1.msra.mxu0 0.0
    %454 = vmatprep.subr.mxu0 0.0
    %455 = vmatpush1.msra.mxu0 0.0
    %456 = vmatprep.subr.mxu0 0.0
    %457 = vmatpush1.msra.mxu0 0.0
    %458 = vmatprep.subr.mxu0 0.0
    %459 = vmatpush1.msra.mxu0 0.0
    %460 = vmatprep.subr.mxu0 0.0
    %461 = vmatpush1.msra.mxu0 0.0
    %462 = vmatprep.subr.mxu0 0.0
    %463 = vmatpush1.msra.mxu0 0.0
    %464 = vmatprep.subr.mxu0 0.0
    %465 = vmatpush1.msra.mxu0 0.0
    %466 = vmatprep.subr.mxu0 0.0
    %467 = vmatpush1.msra.mxu0 0.0
    %468 = vmatprep.subr.mxu0 0.0
    %469 = vmatpush1.msra.mxu0 %v433
    %470 = vmatprep.subr.mxu0 0.0
    %471 = vmatpush1.msra.mxu0 %v432
    %472 = vmatprep.subr.mxu0 0.0
    %473 = vmatpush1.msra.mxu0 %v431
    %474 = vmatprep.subr.mxu0 0.0
    %475 = vmatpush1.msra.mxu0 %v430
    %476 = vmatprep.subr.mxu0 0.0
    %477 = vmatpush2.msra.mxu0 0.0
    %478 = vmatprep.subr.mxu0 0.0
    %479 = vmatpush2.msra.mxu0 0.0
    %480 = vmatprep.subr.mxu0 0.0
    %481 = vmatpush2.msra.mxu0 0.0
    %482 = vmatprep.subr.mxu0 0.0
    %483 = vmatpush2.msra.mxu0 0.0
    %484 = vmatprep.subr.mxu0 0.0
    %485 = vmatpush2.msra.mxu0 0.0
    %486 = vmatprep.subr.mxu0 0.0
    %487 = vmatpush2.msra.mxu0 0.0
    %488 = vmatprep.subr.mxu0 0.0
    %489 = vmatpush2.msra.mxu0 0.0
    %490 = vmatprep.subr.mxu0 0.0
    %491 = vmatpush2.msra.mxu0 0.0
    %492 = vmatprep.subr.mxu0 0.0
    %493 = vmatpush2.msra.mxu0 0.0
    %494 = vmatprep.subr.mxu0 0.0
    %495 = vmatpush2.msra.mxu0 0.0
    %496 = vmatprep.subr.mxu0 0.0
    %497 = vmatpush2.msra.mxu0 0.0
    %498 = vmatprep.subr.mxu0 0.0
    %499 = vmatpush2.msra.mxu0 0.0
    %500 = vmatprep.subr.mxu0 0.0
    %501 = vmatpush2.msra.mxu0 0.0
    %502 = vmatprep.subr.mxu0 0.0
    %503 = vmatpush2.msra.mxu0 0.0
    %504 = vmatprep.subr.mxu0 0.0
    %505 = vmatpush2.msra.mxu0 0.0
    %506 = vmatprep.subr.mxu0 0.0
    %507 = vmatpush2.msra.mxu0 0.0
    %508 = vmatprep.mubr.f32.mxu0 0.0
    %509 = vmatmul.mubr.f32.gmra.mxu0 %v442
    %v510 = vpop.f32.mrf.mxu0
    %v511 = vadd.f32 %v439, %v510
    %v512 = vpop.f32.mrf.mxu0
    %513 = vdwg.mxu0
    %v514 = vmax.f32 %v511, 0.0
    %515 = vrot.lane.b32.xlu0 %v514, 8
    %v516 = vpop.permute.xlu0 %515
    %517 = vrot.lane.b32.xlu0 %v514, 120
    %v518 = vpop.permute.xlu0 %517
    %519 = vrot.lane.b32.xlu0 %v516, 1
    %v520 = vpop.permute.xlu0 %519
    %v521 = vld [vmem:[%s9] sm:$0x1]
    %v522 = vlaneseq
    %v523 = vshrl.u32 %v522, 7
    %v524 = vsub.s32 0, %v523
    %v525 = vrot.slane %v521, %v524
    %v526 = vmul.f32 %v520, %v525
    %527 = vst [vmem:[#allocation3] sm:$0xff] %v526
    %v528 = vld [vmem:[%s9 + $0x1] sm:$0x1]
    %v529 = vlaneseq
    %v530 = vshrl.u32 %v529, 7
    %v531 = vsub.s32 0, %v530
    %v532 = vrot.slane %v528, %v531
    %v533 = vmul.f32 %v516, %v532
    %534 = vst [vmem:[#allocation3 + $0x8] sm:$0xff] %v533
    %535 = vrot.lane.b32.xlu0 %v516, 127
    %v536 = vpop.permute.xlu0 %535
    %v537 = vld [vmem:[%s9 + $0x2] sm:$0x1]
    %v538 = vlaneseq
    %v539 = vshrl.u32 %v538, 7
    %v540 = vsub.s32 0, %v539
    %v541 = vrot.slane %v537, %v540
    %v542 = vmul.f32 %v536, %v541
    %543 = vst [vmem:[#allocation3 + $0x10] sm:$0xff] %v542
    %544 = vrot.lane.b32.xlu0 %v514, 1
    %v545 = vpop.permute.xlu0 %544
    %v546 = vld [vmem:[%s9 + $0x3] sm:$0x1]
    %v547 = vlaneseq
    %v548 = vshrl.u32 %v547, 7
    %v549 = vsub.s32 0, %v548
    %v550 = vrot.slane %v546, %v549
    %v551 = vmul.f32 %v545, %v550
    %552 = vst [vmem:[#allocation3 + $0x18] sm:$0xff] %v551
    %v553 = vld [vmem:[%s9 + $0x4] sm:$0x1]
    %v554 = vlaneseq
    %v555 = vshrl.u32 %v554, 7
    %v556 = vsub.s32 0, %v555
    %v557 = vrot.slane %v553, %v556
    %v558 = vmul.f32 %v514, %v557
    %559 = vst [vmem:[#allocation3 + $0x20] sm:$0xff] %v558
    %560 = vrot.lane.b32.xlu0 %v514, 127
    %v561 = vpop.permute.xlu0 %560
    %v562 = vld [vmem:[%s9 + $0x5] sm:$0x1]
    %v563 = vlaneseq
    %v564 = vshrl.u32 %v563, 7
    %v565 = vsub.s32 0, %v564
    %v566 = vrot.slane %v562, %v565
    %v567 = vmul.f32 %v561, %v566
    %568 = vst [vmem:[#allocation3 + $0x28] sm:$0xff] %v567
    %569 = vrot.lane.b32.xlu0 %v518, 1
    %v570 = vpop.permute.xlu0 %569
    %v571 = vld [vmem:[%s9 + $0x6] sm:$0x1]
    %v572 = vlaneseq
    %v573 = vshrl.u32 %v572, 7
    %v574 = vsub.s32 0, %v573
    %v575 = vrot.slane %v571, %v574
    %v576 = vmul.f32 %v570, %v575
    %577 = vst [vmem:[#allocation3 + $0x30] sm:$0xff] %v576
    %v578 = vld [vmem:[%s9 + $0x7] sm:$0x1]
    %v579 = vlaneseq
    %v580 = vshrl.u32 %v579, 7
    %v581 = vsub.s32 0, %v580
    %v582 = vrot.slane %v578, %v581
    %v583 = vmul.f32 %v518, %v582
    %584 = vst [vmem:[#allocation3 + $0x38] sm:$0xff] %v583
    %585 = vrot.lane.b32.xlu0 %v518, 127
    %v586 = vpop.permute.xlu0 %585
    %v587 = vld [vmem:[%s9 + $0x8] sm:$0x1]
    %v588 = vlaneseq
    %v589 = vshrl.u32 %v588, 7
    %v590 = vsub.s32 0, %v589
    %v591 = vrot.slane %v587, %v590
    %v592 = vmul.f32 %v586, %v591
    %593 = vst [vmem:[#allocation3 + $0x40] sm:$0xff] %v592
    %v594 = vld [vmem:[%s6] sm:$0xff]
    %v595 = vld [vmem:[#allocation3] sm:$0xff]
    %v596 = vld [vmem:[#allocation3 + $0x8] sm:$0xff]
    %v597 = vld [vmem:[#allocation3 + $0x10] sm:$0xff]
    %v598 = vld [vmem:[#allocation3 + $0x18] sm:$0xff]
    %v599 = vld [vmem:[#allocation3 + $0x20] sm:$0xff]
    %v600 = vld [vmem:[#allocation3 + $0x28] sm:$0xff]
    %v601 = vld [vmem:[#allocation3 + $0x30] sm:$0xff]
    %v602 = vld [vmem:[#allocation3 + $0x38] sm:$0xff]
    %v603 = vld [vmem:[#allocation3 + $0x40] sm:$0xff]
    %v604 = vld [vmem:[%s7] sm:$0xff]
    %606 = vset.pattern.permute.xlu0 0
    %607 = vperm.xlu0 %606, %v604
    %v608 = vpop.permute.xlu0 %607
    %vm610 = vcmask 588800
    %v612 = vsel %vm610, %v594, 0
    %614 = vmatprep.subr.mxu0 0.0
    %615 = vmatpush1.msra.mxu0 0.0
    %616 = vmatprep.subr.mxu0 0.0
    %617 = vmatpush1.msra.mxu0 0.0
    %618 = vmatprep.subr.mxu0 0.0
    %619 = vmatpush1.msra.mxu0 0.0
    %620 = vmatprep.subr.mxu0 0.0
    %621 = vmatpush1.msra.mxu0 0.0
    %622 = vmatprep.subr.mxu0 0.0
    %623 = vmatpush1.msra.mxu0 0.0
    %624 = vmatprep.subr.mxu0 0.0
    %625 = vmatpush1.msra.mxu0 0.0
    %626 = vmatprep.subr.mxu0 0.0
    %627 = vmatpush1.msra.mxu0 0.0
    %628 = vmatprep.subr.mxu0 0.0
    %629 = vmatpush1.msra.mxu0 %v603
    %630 = vmatprep.subr.mxu0 0.0
    %631 = vmatpush1.msra.mxu0 %v602
    %632 = vmatprep.subr.mxu0 0.0
    %633 = vmatpush1.msra.mxu0 %v601
    %634 = vmatprep.subr.mxu0 0.0
    %635 = vmatpush1.msra.mxu0 %v600
    %636 = vmatprep.subr.mxu0 0.0
    %637 = vmatpush1.msra.mxu0 %v599
    %638 = vmatprep.subr.mxu0 0.0
    %639 = vmatpush1.msra.mxu0 %v598
    %640 = vmatprep.subr.mxu0 0.0
    %641 = vmatpush1.msra.mxu0 %v597
    %642 = vmatprep.subr.mxu0 0.0
    %643 = vmatpush1.msra.mxu0 %v596
    %644 = vmatprep.subr.mxu0 0.0
    %645 = vmatpush1.msra.mxu0 %v595
    %646 = vmatprep.subr.mxu0 0.0
    %647 = vmatpush2.msra.mxu0 0.0
    %648 = vmatprep.subr.mxu0 0.0
    %649 = vmatpush2.msra.mxu0 0.0
    %650 = vmatprep.subr.mxu0 0.0
    %651 = vmatpush2.msra.mxu0 0.0
    %652 = vmatprep.subr.mxu0 0.0
    %653 = vmatpush2.msra.mxu0 0.0
    %654 = vmatprep.subr.mxu0 0.0
    %655 = vmatpush2.msra.mxu0 0.0
    %656 = vmatprep.subr.mxu0 0.0
    %657 = vmatpush2.msra.mxu0 0.0
    %658 = vmatprep.subr.mxu0 0.0
    %659 = vmatpush2.msra.mxu0 0.0
    %660 = vmatprep.subr.mxu0 0.0
    %661 = vmatpush2.msra.mxu0 0.0
    %662 = vmatprep.subr.mxu0 0.0
    %663 = vmatpush2.msra.mxu0 0.0
    %664 = vmatprep.subr.mxu0 0.0
    %665 = vmatpush2.msra.mxu0 0.0
    %666 = vmatprep.subr.mxu0 0.0
    %667 = vmatpush2.msra.mxu0 0.0
    %668 = vmatprep.subr.mxu0 0.0
    %669 = vmatpush2.msra.mxu0 0.0
    %670 = vmatprep.subr.mxu0 0.0
    %671 = vmatpush2.msra.mxu0 0.0
    %672 = vmatprep.subr.mxu0 0.0
    %673 = vmatpush2.msra.mxu0 0.0
    %674 = vmatprep.subr.mxu0 0.0
    %675 = vmatpush2.msra.mxu0 0.0
    %676 = vmatprep.subr.mxu0 0.0
    %677 = vmatpush2.msra.mxu0 0.0
    %678 = vmatprep.mubr.f32.mxu0 0.0
    %679 = vmatmul.mubr.f32.gmra.mxu0 %v612
    %v680 = vpop.f32.mrf.mxu0
    %v681 = vadd.f32 %v608, %v680
    %v682 = vpop.f32.mrf.mxu0
    %683 = vdwg.mxu0
    %v684 = vmax.f32 %v681, 0.0
    %v685 = vld [vmem:[%s8] sm:$0x1]
    %v687 = vsel %vm250, %v685, 0
    %689 = vmatprep.subr.mxu0 0.0
    %690 = vmatpush1.msra.mxu0 0.0
    %691 = vmatprep.subr.mxu0 0.0
    %692 = vmatpush1.msra.mxu0 0.0
    %693 = vmatprep.subr.mxu0 0.0
    %694 = vmatpush1.msra.mxu0 0.0
    %695 = vmatprep.subr.mxu0 0.0
    %696 = vmatpush1.msra.mxu0 0.0
    %697 = vmatprep.subr.mxu0 0.0
    %698 = vmatpush1.msra.mxu0 0.0
    %699 = vmatprep.subr.mxu0 0.0
    %700 = vmatpush1.msra.mxu0 0.0
    %701 = vmatprep.subr.mxu0 0.0
    %702 = vmatpush1.msra.mxu0 0.0
    %703 = vmatprep.subr.mxu0 0.0
    %704 = vmatpush1.msra.mxu0 0.0
    %705 = vmatprep.subr.mxu0 0.0
    %706 = vmatpush1.msra.mxu0 0.0
    %707 = vmatprep.subr.mxu0 0.0
    %708 = vmatpush1.msra.mxu0 0.0
    %709 = vmatprep.subr.mxu0 0.0
    %710 = vmatpush1.msra.mxu0 0.0
    %711 = vmatprep.subr.mxu0 0.0
    %712 = vmatpush1.msra.mxu0 0.0
    %713 = vmatprep.subr.mxu0 0.0
    %714 = vmatpush1.msra.mxu0 0.0
    %715 = vmatprep.subr.mxu0 0.0
    %716 = vmatpush1.msra.mxu0 0.0
    %717 = vmatprep.subr.mxu0 0.0
    %718 = vmatpush1.msra.mxu0 0.0
    %719 = vmatprep.subr.mxu0 0.0
    %720 = vmatpush1.msra.mxu0 %v684
    %721 = vmatprep.subr.mxu0 0.0
    %722 = vmatpush2.msra.mxu0 0.0
    %723 = vmatprep.subr.mxu0 0.0
    %724 = vmatpush2.msra.mxu0 0.0
    %725 = vmatprep.subr.mxu0 0.0
    %726 = vmatpush2.msra.mxu0 0.0
    %727 = vmatprep.subr.mxu0 0.0
    %728 = vmatpush2.msra.mxu0 0.0
    %729 = vmatprep.subr.mxu0 0.0
    %730 = vmatpush2.msra.mxu0 0.0
    %731 = vmatprep.subr.mxu0 0.0
    %732 = vmatpush2.msra.mxu0 0.0
    %733 = vmatprep.subr.mxu0 0.0
    %734 = vmatpush2.msra.mxu0 0.0
    %735 = vmatprep.subr.mxu0 0.0
    %736 = vmatpush2.msra.mxu0 0.0
    %737 = vmatprep.subr.mxu0 0.0
    %738 = vmatpush2.msra.mxu0 0.0
    %739 = vmatprep.subr.mxu0 0.0
    %740 = vmatpush2.msra.mxu0 0.0
    %741 = vmatprep.subr.mxu0 0.0
    %742 = vmatpush2.msra.mxu0 0.0
    %743 = vmatprep.subr.mxu0 0.0
    %744 = vmatpush2.msra.mxu0 0.0
    %745 = vmatprep.subr.mxu0 0.0
    %746 = vmatpush2.msra.mxu0 0.0
    %747 = vmatprep.subr.mxu0 0.0
    %748 = vmatpush2.msra.mxu0 0.0
    %749 = vmatprep.subr.mxu0 0.0
    %750 = vmatpush2.msra.mxu0 0.0
    %751 = vmatprep.subr.mxu0 0.0
    %752 = vmatpush2.msra.mxu0 0.0
    %753 = vmatprep.mubr.f32.mxu0 0.0
    %754 = vmatmul.mubr.f32.gmra.mxu0 %v687
    %v755 = vpop.f32.mrf.mxu0
    %v756 = vadd.f32 0.0, %v755
    %v757 = vpop.f32.mrf.mxu0
    %758 = vdwg.mxu0
    %v759 = vxor.u32 %v756, 2147483648
    %v760 = vmul.f32 %v759, 1.442695
    %v761 = vpow.pop %v760
    %v762 = vadd.f32 %v761, 1.0
    %v763 = vrcp.pop %v762
    %v764 = vmul.f32 1.0, %v763
    %v765 = vlaneseq
    %v766 = vshrl.u32 %v765, 7
    %v767 = vsub.s32 0, %v766
    %v768 = vrot.slane %v764, %v767
    %v769 = vmul.f32 %v430, %v768
    %v770 = vmul.f32 %v431, %v768
    %v771 = vmul.f32 %v432, %v768
    %v772 = vmul.f32 %v433, %v768
    %v773 = vpack.c.bf16 %v770, %v769
    %v774 = vpack.c.bf16 %v772, %v771
    %v777 = vunpack.c.l.b16 %v773
    %v778 = vunpack.c.h.b16 %v773
    %v779 = vunpack.c.l.b16 %v774
    %v780 = vunpack.c.h.b16 %v774
    %v781 = vpack.c.b16 %v777, %v777
    %v782 = vpack.c.b16 %v778, %v778
    %v783 = vpack.c.b16 %v779, %v779
    %v784 = vpack.c.b16 %v780, %v780
    %789 = vst [vmem:[#allocation4] sm:$0xf] %v781
    %790 = vst [vmem:[#allocation4 + $0x4] sm:$0xf] %v782
    %791 = vst [vmem:[#allocation4 + $0x8] sm:$0xf] %v783
    %792 = vst [vmem:[#allocation4 + $0xc] sm:$0xf] %v784
    // Predicated region
    $region42: #{tpu_custom_call.1} parent=1 // pred_check
      _
    $region43: #{tpu_custom_call.1} parent=1 // pred_check_branch
      %794 = sbr.rel (0) target = $region45
    $region44: #{tpu_custom_call.1} parent=1 // pred_region
      %s796 = ssub.s32 256, 256
      %797 = vsyncadd [#allocation5], %s796
      %s798 = sshll.u32 [#allocation4], 4
      %s799 = int_to_ptr.vmem [resolvable:$true] %s798
      %804 = dma.vmem_to_hbm [thread:$0]  %s799, 256, %s10, [#allocation5], 64, 64, 4
    $region45: #{tpu_custom_call.1} parent=1 // pred_fallthru
      _
    // Predicated region
    $region46: #{tpu_custom_call.1} parent=1 // pred_check
      _
    $region47: #{tpu_custom_call.1} parent=1 // pred_check_branch
      %806 = sbr.rel (0) target = $region49
    $region48: #{tpu_custom_call.1} parent=1 // pred_region
      %807 = dma.done [#allocation5], 256
    $region49: #{tpu_custom_call.1} parent=1 // pred_fallthru
      _
    %808 = vsyncpa [#allocation5], 1

</llo_original>
